<compile_context>
chip_gen: v7x
topology: tpu7x:2x2x1
jax: 0.10.0
libtpu: 0.0.40
codegen_flags: <defaults>
</compile_context>

<pallas_src>
import functools

import jax
import jax.numpy as jnp
from jax.experimental import pallas as pl
from jax.experimental.pallas import tpu as pltpu

# GEMM tile preferences. v6e/v7x MXU is 2x256x256; on v5e (4x128x128) the larger
# M tile still amortizes the ~0.35us/grid-step overhead.
TM_PREF = 256
TN_PREF = 256
# Keep the full (K, Cout) weight resident per grid step (single N tile) when the
# bf16 weight is at most this many bytes (late ResNet layers are weight-bound).
_WEIGHT_RESIDENT_BYTES = 2 * 1024 * 1024


def _round_up(x, m):
    return (x + m - 1) // m * m


def _row_tile(rows, row_bytes, target_bytes=1 << 20):
    """Row tile (multiple of 8, or full extent) so one block is ~target_bytes."""
    if rows * row_bytes <= target_bytes:
        return rows
    t = max(8, (target_bytes // row_bytes) // 8 * 8)
    return min(rows, t)


# ----------------------------- Pallas kernels ---------------------------------


def _gemm_bn_kernel(a_ref, b_ref, s_ref, c_ref, o_ref, *, relu):
    # bf16 (tm, K) @ bf16 (K, tn) on the MXU with f32 accumulation, then
    # per-output-channel scale/bias (+ReLU) in f32.
    acc = jnp.dot(a_ref[...], b_ref[...], preferred_element_type=jnp.float32)
    y = acc * s_ref[...] + c_ref[...]
    if relu:
        y = jnp.maximum(y, 0.0)
    o_ref[...] = y


def _add_relu_kernel(x_ref, y_ref, o_ref):
    o_ref[...] = jnp.maximum(x_ref[...] + y_ref[...], 0.0)


def _max9_kernel(*refs):
    # 9 tap refs + 1 output ref, all (tr, C): elementwise max over the taps.
    o_ref = refs[-1]
    m = refs[0][...]
    for r in refs[1:-1]:
        m = jnp.maximum(m, r[...])
    o_ref[...] = m


def _mean_hw_kernel(x_ref, o_ref):
    # x: (1, H*W, C) -> (1, 1, C) spatial mean.
    o_ref[...] = jnp.mean(x_ref[...], axis=1, keepdims=True)


# ----------------------------- Pallas wrappers ---------------------------------


def gemm_bn(patches, w_mat, scale, bias, relu):
    """patches (M, K) @ w_mat (K, Cout) (bf16 MXU), then per-column scale/bias (+ReLU)."""
    M, K = patches.shape
    Cout = w_mat.shape[1]

    a = patches.astype(jnp.bfloat16)
    b = w_mat.astype(jnp.bfloat16)

    # Tile selection: full extent when it fits, otherwise 256-wide tiles with
    # Pallas partial edge blocks (no host-side zero-padded copies of A/B).
    tm = M if M <= TM_PREF else TM_PREF
    if Cout <= TN_PREF or K * Cout * 2 <= _WEIGHT_RESIDENT_BYTES:
        tn = Cout  # whole weight column range resident per grid step
    else:
        tn = TN_PREF

    # Keep the (tiny) scale/bias vectors zero-padded so no garbage can enter the
    # epilogue of kept columns even with partial N blocks.
    n_pad = _round_up(Cout, tn)
    if n_pad == Cout:
        s = scale.reshape(1, Cout)
        c = bias.reshape(1, Cout)
    else:
        s = jnp.zeros((1, n_pad), jnp.float32).at[0, :Cout].set(scale)
        c = jnp.zeros((1, n_pad), jnp.float32).at[0, :Cout].set(bias)

    cost = pl.CostEstimate(
        flops=2 * M * K * Cout,
        transcendentals=0,
        bytes_accessed=a.size * 2 + b.size * 2 + M * Cout * 4,
    )
    out = pl.pallas_call(
        functools.partial(_gemm_bn_kernel, relu=relu),
        out_shape=jax.ShapeDtypeStruct((M, Cout), jnp.float32),
        grid=(pl.cdiv(M, tm), pl.cdiv(Cout, tn)),
        in_specs=[
            pl.BlockSpec((tm, K), lambda i, j: (i, 0)),
            pl.BlockSpec((K, tn), lambda i, j: (0, j)),
            pl.BlockSpec((1, tn), lambda i, j: (0, j)),
            pl.BlockSpec((1, tn), lambda i, j: (0, j)),
        ],
        out_specs=pl.BlockSpec((tm, tn), lambda i, j: (i, j)),
        compiler_params=pltpu.CompilerParams(
            dimension_semantics=("parallel", "parallel")),
        cost_estimate=cost,
    )(a, b, s, c)
    return out


def add_relu(x, y):
    shp = x.shape
    C = shp[-1]
    x2 = x.reshape(-1, C)
    y2 = y.reshape(-1, C)
    M = x2.shape[0]
    tr = _row_tile(M, C * 4)
    spec = pl.BlockSpec((tr, C), lambda i: (i, 0))
    out = pl.pallas_call(
        _add_relu_kernel,
        out_shape=jax.ShapeDtypeStruct((M, C), jnp.float32),
        grid=(pl.cdiv(M, tr),),
        in_specs=[spec, spec],
        out_specs=spec,
        compiler_params=pltpu.CompilerParams(dimension_semantics=("parallel",)),
    )(x2, y2)
    return out.reshape(shp)


# ----------------------------- glue (im2col, pooling setup) --------------------


def _extract_patches(x, kh, kw, stride, pad):
    """x: (N,H,W,C) -> patches (N,Ho,Wo,kh*kw*C) with tap order (kh, kw, C)."""
    N, H, W, C = x.shape
    if pad > 0:
        x = jnp.pad(x, ((0, 0), (pad, pad), (pad, pad), (0, 0)))
    Hp, Wp = H + 2 * pad, W + 2 * pad
    Ho = (Hp - kh) // stride + 1
    Wo = (Wp - kw) // stride + 1
    cols = []
    for i in range(kh):
        for j in range(kw):
            cols.append(x[:, i:i + stride * Ho:stride, j:j + stride * Wo:stride, :])
    return jnp.concatenate(cols, axis=-1), Ho, Wo


def conv_bn(x, p, stride, pad, relu, use_pallas=True):
    """Conv2d (no bias) + folded BatchNorm (+ optional ReLU)."""
    w, scale, bias = p["w"], p["scale"], p["bias"]  # w: (kh, kw, Cin, Cout)
    kh, kw, cin, cout = w.shape
    N = x.shape[0]
    # Cast activations/weights to bf16 *before* im2col so the patches
    # intermediate (largest tensor on this path) is half-width in HBM.
    patches, Ho, Wo = _extract_patches(x.astype(jnp.bfloat16), kh, kw, stride, pad)
    pm = patches.reshape(N * Ho * Wo, kh * kw * cin)
    wm = w.astype(jnp.bfloat16).reshape(kh * kw * cin, cout)
    if use_pallas:
        out = gemm_bn(pm, wm, scale, bias, relu)
    else:
        # Reference path: identical bf16-operand / f32-accumulate math.
        out = jnp.dot(pm, wm, preferred_element_type=jnp.float32) * scale + bias
        if relu:
            out = jnp.maximum(out, 0.0)
    return out.reshape(N, Ho, Wo, cout)


def maxpool_3x3_s2(x, use_pallas=True):
    N, H, W, C = x.shape
    k, stride, pad = 3, 2, 1
    Ho = (H + 2 * pad - k) // stride + 1
    Wo = (W + 2 * pad - k) // stride + 1
    xp = jnp.pad(x, ((0, 0), (pad, pad), (pad, pad), (0, 0)),
                 constant_values=-jnp.inf)
    taps = [
        xp[:, i:i + stride * Ho:stride, j:j + stride * Wo:stride, :]
        .reshape(N * Ho * Wo, C)
        for i in range(k) for j in range(k)
    ]
    if not use_pallas:
        return jnp.max(jnp.stack(taps, axis=0), axis=0).reshape(N, Ho, Wo, C)
    M = N * Ho * Wo
    tr = _row_tile(M, C * 4, target_bytes=256 * 1024)
    spec = pl.BlockSpec((tr, C), lambda i: (i, 0))
    out = pl.pallas_call(
        _max9_kernel,
        out_shape=jax.ShapeDtypeStruct((M, C), jnp.float32),
        grid=(pl.cdiv(M, tr),),
        in_specs=[spec] * 9,
        out_specs=spec,
        compiler_params=pltpu.CompilerParams(dimension_semantics=("parallel",)),
    )(*taps)
    return out.reshape(N, Ho, Wo, C)


def global_avg_pool(x, use_pallas=True):
    N, H, W, C = x.shape
    x2 = x.reshape(N, H * W, C)
    if not use_pallas:
        return jnp.mean(x2, axis=1)
    out = pl.pallas_call(
        _mean_hw_kernel,
        out_shape=jax.ShapeDtypeStruct((N, 1, C), jnp.float32),
        grid=(N,),
        in_specs=[pl.BlockSpec((1, H * W, C), lambda i: (i, 0, 0))],
        out_specs=pl.BlockSpec((1, 1, C), lambda i: (i, 0, 0)),
        compiler_params=pltpu.CompilerParams(dimension_semantics=("parallel",)),
    )(x2)
    return out.reshape(N, C)


# ----------------------------- ResNet-50 structure ------------------------------

_BN_EPS = 1e-5


def make_conv_bn_params(key, kh, kw, cin, cout):
    k_w, k_g, k_b = jax.random.split(key, 3)
    fan_in = kh * kw * cin
    w = jax.random.normal(k_w, (kh, kw, cin, cout), jnp.float32) * (2.0 / fan_in) ** 0.5
    gamma = 1.0 + 0.05 * jax.random.normal(k_g, (cout,), jnp.float32)
    beta = 0.05 * jax.random.normal(k_b, (cout,), jnp.float32)
    run_mean = jnp.zeros((cout,), jnp.float32)
    run_var = jnp.ones((cout,), jnp.float32)
    scale = gamma / jnp.sqrt(run_var + _BN_EPS)
    bias = beta - run_mean * scale
    return {"w": w, "scale": scale, "bias": bias}


def make_bottleneck_params(keys, inplanes, planes, stride):
    exp = 4
    p = {
        "conv1": make_conv_bn_params(next(keys), 1, 1, inplanes, planes),
        "conv2": make_conv_bn_params(next(keys), 3, 3, planes, planes),
        "conv3": make_conv_bn_params(next(keys), 1, 1, planes, planes * exp),
        "stride": stride,
    }
    if stride != 1 or inplanes != planes * exp:
        p["downsample"] = make_conv_bn_params(next(keys), 1, 1, inplanes, planes * exp)
    return p


def make_resnet50_params(key):
    keys = iter(jax.random.split(key, 256))
    params = {"conv1": make_conv_bn_params(next(keys), 7, 7, 3, 64)}
    inplanes = 64
    cfg = [("layer1", 64, 3, 1), ("layer2", 128, 4, 2),
           ("layer3", 256, 6, 2), ("layer4", 512, 3, 2)]
    for name, planes, nblocks, stride in cfg:
        blocks = []
        for b in range(nblocks):
            s = stride if b == 0 else 1
            blocks.append(make_bottleneck_params(keys, inplanes, planes, s))
            inplanes = planes * 4
        params[name] = blocks
    return params


def bottleneck_forward(x, p, use_pallas=True):
    identity = x
    out = conv_bn(x, p["conv1"], stride=1, pad=0, relu=True, use_pallas=use_pallas)
    out = conv_bn(out, p["conv2"], stride=p["stride"], pad=1, relu=True, use_pallas=use_pallas)
    out = conv_bn(out, p["conv3"], stride=1, pad=0, relu=False, use_pallas=use_pallas)
    if "downsample" in p:
        identity = conv_bn(x, p["downsample"], stride=p["stride"], pad=0,
                           relu=False, use_pallas=use_pallas)
    if use_pallas:
        return add_relu(out, identity)
    return jnp.maximum(out + identity, 0.0)


def resnet50_forward(x_nchw, params, use_pallas=True):
    """Equivalent of Resnet50.forward: backbone (no fc) + squeeze of the 1x1 spatial dims."""
    x = jnp.transpose(x_nchw, (0, 2, 3, 1)).astype(jnp.float32)  # NCHW -> NHWC
    x = conv_bn(x, params["conv1"], stride=2, pad=3, relu=True, use_pallas=use_pallas)
    x = maxpool_3x3_s2(x, use_pallas=use_pallas)
    for layer in ("layer1", "layer2", "layer3", "layer4"):
        for block_p in params[layer]:
            x = bottleneck_forward(x, block_p, use_pallas=use_pallas)
    # AdaptiveAvgPool2d((1,1)) then .squeeze(-1).squeeze(-1) -> (N, 2048)
    return global_avg_pool(x, use_pallas=use_pallas)


# ----------------------------- driver ------------------------------------------

if __name__ == "__main__":
    # Small but architecturally valid input: 3 channels, 32x32 spatial (-> 1x1 before avgpool).
    x = jax.random.normal(jax.random.PRNGKey(0), (2, 3, 32, 32), jnp.float32)
    params = make_resnet50_params(jax.random.PRNGKey(1))

    out = resnet50_forward(x, params, use_pallas=True)
    out = jax.block_until_ready(out)

    assert out.shape == (2, 2048), out.shape
    assert bool(jnp.all(jnp.isfinite(out)))

    # Correctness sanity check against a pure-JAX reference using the same
    # bf16-operand / f32-accumulate math (only accumulation order differs).
    ref = jax.block_until_ready(resnet50_forward(x, params, use_pallas=False))
    rel_err = float(jnp.max(jnp.abs(out - ref)) / (jnp.max(jnp.abs(ref)) + 1e-6))
    assert rel_err < 2e-2, f"relative error too large: {rel_err}"

    print("KERNEL_OK")
</pallas_src>

<mosaic_0001>
module attributes {stable_mosaic.version = 11 : i64} {
  func.func @_gemm_bn_kernel(%arg0: i32, %arg1: i32, %arg2: memref<256x147xbf16, #tpu.memory_space<vmem>>, %arg3: memref<147x64xbf16, #tpu.memory_space<vmem>>, %arg4: memref<1x64xf32, #tpu.memory_space<vmem>>, %arg5: memref<1x64xf32, #tpu.memory_space<vmem>>, %arg6: memref<256x64xf32, #tpu.memory_space<vmem>>) attributes {dimension_semantics = [#tpu.dimension_semantics<parallel>, #tpu.dimension_semantics<parallel>], iteration_bounds = array<i64: 2, 1>, scalar_prefetch = 0 : i64, scratch_operands = 0 : i64, tpu.core_type = #tpu.core_type<tc>, window_params = [{transform_indices = @transform_0, window_bounds = array<i64: 256, 147>}, {transform_indices = @transform_1, window_bounds = array<i64: 147, 64>}, {transform_indices = @transform_2, window_bounds = array<i64: 1, 64>}, {transform_indices = @transform_3, window_bounds = array<i64: 1, 64>}, {transform_indices = @transform_4, window_bounds = array<i64: 256, 64>}]} {
    %c0 = arith.constant 0 : index
    %c0_0 = arith.constant 0 : index
    %0 = vector.load %arg2[%c0, %c0_0] : memref<256x147xbf16, #tpu.memory_space<vmem>>, vector<256x147xbf16>
    %c0_1 = arith.constant 0 : index
    %c0_2 = arith.constant 0 : index
    %1 = vector.load %arg3[%c0_1, %c0_2] : memref<147x64xbf16, #tpu.memory_space<vmem>>, vector<147x64xbf16>
    %cst = arith.constant dense<0.000000e+00> : vector<256x64xf32>
    %2 = tpu.matmul %0, %1, %cst {dimension_numbers = #tpu.dot_dimension_numbers<[1], [0], [0], [1], [0, 0, 1, 1], [], []>} : vector<256x147xbf16>, vector<147x64xbf16>, vector<256x64xf32> -> vector<256x64xf32>
    %c0_3 = arith.constant 0 : index
    %c0_4 = arith.constant 0 : index
    %3 = vector.load %arg4[%c0_3, %c0_4] : memref<1x64xf32, #tpu.memory_space<vmem>>, vector<1x64xf32>
    %4 = vector.broadcast %3 : vector<1x64xf32> to vector<256x64xf32>
    %5 = arith.mulf %2, %4 : vector<256x64xf32>
    %c0_5 = arith.constant 0 : index
    %c0_6 = arith.constant 0 : index
    %6 = vector.load %arg5[%c0_5, %c0_6] : memref<1x64xf32, #tpu.memory_space<vmem>>, vector<1x64xf32>
    %7 = vector.broadcast %6 : vector<1x64xf32> to vector<256x64xf32>
    %8 = arith.addf %5, %7 : vector<256x64xf32>
    %cst_7 = arith.constant 0.000000e+00 : f32
    %9 = vector.broadcast %cst_7 : f32 to vector<256x64xf32>
    %10 = arith.maximumf %8, %9 : vector<256x64xf32>
    %c0_8 = arith.constant 0 : index
    %c0_9 = arith.constant 0 : index
    %11 = vector.load %arg6[%c0_8, %c0_9] : memref<256x64xf32, #tpu.memory_space<vmem>>, vector<256x64xf32>
    tpu.vector_store %arg6[%c0_8, %c0_9], %10 {strides = array<i32>} : memref<256x64xf32, #tpu.memory_space<vmem>>, vector<256x64xf32>,
    return
  }
  func.func @transform_0(%arg0: i32, %arg1: i32) -> (i32, i32) {
    %c0_i32 = arith.constant 0 : i32
    %c0_i32_0 = arith.constant 0 : i32
    return %arg0, %c0_i32 : i32, i32
  }
  func.func @transform_1(%arg0: i32, %arg1: i32) -> (i32, i32) {
    %c0_i32 = arith.constant 0 : i32
    %c0_i32_0 = arith.constant 0 : i32
    return %c0_i32, %arg1 : i32, i32
  }
  func.func @transform_2(%arg0: i32, %arg1: i32) -> (i32, i32) {
    %c0_i32 = arith.constant 0 : i32
    %c0_i32_0 = arith.constant 0 : i32
    return %c0_i32, %arg1 : i32, i32
  }
  func.func @transform_3(%arg0: i32, %arg1: i32) -> (i32, i32) {
    %c0_i32 = arith.constant 0 : i32
    %c0_i32_0 = arith.constant 0 : i32
    return %c0_i32, %arg1 : i32, i32
  }
  func.func @transform_4(%arg0: i32, %arg1: i32) -> (i32, i32) {
    %c0_i32 = arith.constant 0 : i32
    return %arg0, %arg1 : i32, i32
  }
}

</mosaic_0001>

<llo_original>
// kernel: tpu_custom_call.1
$region0: #{tpu_custom_call.1}
  #allocation0 [shape = 'u32[]', space=smem, size = 0x4, offset = 0x4, fixed_abs, tag = 'smem constant byte address 0x4 - core index']
  #allocation1 [shape = 'u32[144,128]{1,0:T(1,128)}', space=vmem, size = 0x12000, scoped, tag = 'internal scratch']
  %s0 = inlined_call_operand.vmem [shape: bf16[512,147], index: 0, kind: input, shape index: {}]
  %s1 = inlined_call_operand.vmem [shape: bf16[147,64], index: 1, kind: input, shape index: {}]
  %s2 = inlined_call_operand.vmem [shape: f32[1,64], index: 2, kind: input, shape index: {}]
  %s3 = inlined_call_operand.vmem [shape: f32[1,64], index: 3, kind: input, shape index: {}]
  %s4 = inlined_call_operand.vmem [shape: f32[512,64], index: 4, kind: output, shape index: {}]
  %s5 = sld [smem:[#allocation0]]
  $region49: #{tpu_custom_call.1} parent=0
    _
  %s7 = ssub.s32 1, %s5
  %s8 = scalar_select 0, %s7, %s5
  loop: start=0, step=1, limit=4
  $region2: #{tpu_custom_call.1} parent=0 // loop_pre_header
    _
  $region3: #{tpu_custom_call.1} parent=0 // loop_header
    %s10 = sphi 0, %s14
    %p11 = scmp.ge.s32.totalorder %s10, 4
    %s17 = sphi 0, %s29
    %s18 = sphi 0, %s25
    %s19 = sphi 0, %s17
    %s20 = sphi 0, %s18
    %s21 = sphi 0, %s19
    %s22 = sphi 0, %s20
    %s32 = sphi 0, %s34
    %s35 = sphi 0, %s32
    %s36 = sphi 0, %s35
    %s52 = sphi 0, %s36
    %s58 = sphi 0, %s60
    %s61 = sphi 0, %s58
    %s62 = sphi 0, %s61
    %s78 = sphi 0, %s62
    %s84 = sphi 0, %s86
    %s87 = sphi 0, %s84
    %s88 = sphi 0, %s87
    %s104 = sphi 0, %s88
    %s110 = sphi 0, %s112
    %s113 = sphi 0, %s110
    %s114 = sphi 0, %s113
    %s130 = sphi 0, %s114
    %s138 = sphi 0, %s140
    %s141 = sphi 0, %s138
    %s142 = sphi 0, %s141
    %s158 = sphi 0, %s142
  $region4: #{tpu_custom_call.1} parent=0 // loop_header_branch
    %13 = sbr.rel (%p11) target = $region8
  $region5: #{tpu_custom_call.1} parent=0 // loop_body
    %s15 = ssub.s32 %s10, 1
    %s16 = ssub.s32 %s10, 2
    %s23 = sadd.s32 1, %s18
    %p24 = scmp.ge.s32.totalorder %s23, 1
    %s25 = scalar_select %p24, 0, %s23
    %s26 = sadd.s32 1, %s17
    %s27 = scalar_select %p24, %s26, %s17
    %p28 = scmp.ge.s32.totalorder %s27, 2
    %s29 = scalar_select %p28, 0, %s27
    %s30 = ssub.s32 %s17, %s29
    %p31 = scmp.eq.s32.totalorder %s30, 0
    %s33 = sadd.s32 %s32, 1
    %s34 = scalar_select %p31, %s32, %s33
    %p37 = pneg %p31
    %p38 = scmp.eq.s32.totalorder %s10, 1
    %p39 = por %p37, %p38
    %p40 = scmp.ne.s32.totalorder %s32, %s35
    %p41 = scmp.eq.s32.totalorder %s10, 0
    %p42 = por %p40, %p41
    %p43 = scmp.ne.s32.totalorder %s32, %s35
    %p44 = scmp.eq.s32.totalorder %s15, 1
    %p45 = por %p43, %p44
    %p46 = scmp.ne.s32.totalorder %s35, %s36
    %p47 = scmp.eq.s32.totalorder %s15, 0
    %p48 = por %p46, %p47
    %p49 = scmp.ne.s32.totalorder %s35, %s36
    %p50 = scmp.eq.s32.totalorder %s16, 1
    %p51 = por %p49, %p50
    %p53 = scmp.ne.s32.totalorder %s36, %s52
    %p54 = scmp.eq.s32.totalorder %s16, 0
    %p55 = por %p53, %p54
    %s56 = ssub.s32 %s18, %s25
    %p57 = scmp.eq.s32.totalorder %s56, 0
    %s59 = sadd.s32 %s58, 1
    %s60 = scalar_select %p57, %s58, %s59
    %p63 = pneg %p57
    %p64 = scmp.eq.s32.totalorder %s10, 1
    %p65 = por %p63, %p64
    %p66 = scmp.ne.s32.totalorder %s58, %s61
    %p67 = scmp.eq.s32.totalorder %s10, 0
    %p68 = por %p66, %p67
    %p69 = scmp.ne.s32.totalorder %s58, %s61
    %p70 = scmp.eq.s32.totalorder %s15, 1
    %p71 = por %p69, %p70
    %p72 = scmp.ne.s32.totalorder %s61, %s62
    %p73 = scmp.eq.s32.totalorder %s15, 0
    %p74 = por %p72, %p73
    %p75 = scmp.ne.s32.totalorder %s61, %s62
    %p76 = scmp.eq.s32.totalorder %s16, 1
    %p77 = por %p75, %p76
    %p79 = scmp.ne.s32.totalorder %s62, %s78
    %p80 = scmp.eq.s32.totalorder %s16, 0
    %p81 = por %p79, %p80
    %s82 = ssub.s32 %s18, %s25
    %p83 = scmp.eq.s32.totalorder %s82, 0
    %s85 = sadd.s32 %s84, 1
    %s86 = scalar_select %p83, %s84, %s85
    %p89 = pneg %p83
    %p90 = scmp.eq.s32.totalorder %s10, 1
    %p91 = por %p89, %p90
    %p92 = scmp.ne.s32.totalorder %s84, %s87
    %p93 = scmp.eq.s32.totalorder %s10, 0
    %p94 = por %p92, %p93
    %p95 = scmp.ne.s32.totalorder %s84, %s87
    %p96 = scmp.eq.s32.totalorder %s15, 1
    %p97 = por %p95, %p96
    %p98 = scmp.ne.s32.totalorder %s87, %s88
    %p99 = scmp.eq.s32.totalorder %s15, 0
    %p100 = por %p98, %p99
    %p101 = scmp.ne.s32.totalorder %s87, %s88
    %p102 = scmp.eq.s32.totalorder %s16, 1
    %p103 = por %p101, %p102
    %p105 = scmp.ne.s32.totalorder %s88, %s104
    %p106 = scmp.eq.s32.totalorder %s16, 0
    %p107 = por %p105, %p106
    %s108 = ssub.s32 %s18, %s25
    %p109 = scmp.eq.s32.totalorder %s108, 0
    %s111 = sadd.s32 %s110, 1
    %s112 = scalar_select %p109, %s110, %s111
    %p115 = pneg %p109
    %p116 = scmp.eq.s32.totalorder %s10, 1
    %p117 = por %p115, %p116
    %p118 = scmp.ne.s32.totalorder %s110, %s113
    %p119 = scmp.eq.s32.totalorder %s10, 0
    %p120 = por %p118, %p119
    %p121 = scmp.ne.s32.totalorder %s110, %s113
    %p122 = scmp.eq.s32.totalorder %s15, 1
    %p123 = por %p121, %p122
    %p124 = scmp.ne.s32.totalorder %s113, %s114
    %p125 = scmp.eq.s32.totalorder %s15, 0
    %p126 = por %p124, %p125
    %p127 = scmp.ne.s32.totalorder %s113, %s114
    %p128 = scmp.eq.s32.totalorder %s16, 1
    %p129 = por %p127, %p128
    %p131 = scmp.ne.s32.totalorder %s114, %s130
    %p132 = scmp.eq.s32.totalorder %s16, 0
    %p133 = por %p131, %p132
    %s134 = ssub.s32 %s17, %s29
    %s135 = ssub.s32 %s18, %s25
    %s136 = sor.u32 %s134, %s135
    %p137 = scmp.eq.s32.totalorder %s136, 0
    %s139 = sadd.s32 %s138, 1
    %s140 = scalar_select %p137, %s138, %s139
    %p143 = pneg %p137
    %p144 = scmp.eq.s32.totalorder %s10, 1
    %p145 = por %p143, %p144
    %p146 = scmp.ne.s32.totalorder %s138, %s141
    %p147 = scmp.eq.s32.totalorder %s10, 0
    %p148 = por %p146, %p147
    %p149 = scmp.ne.s32.totalorder %s138, %s141
    %p150 = scmp.eq.s32.totalorder %s15, 1
    %p151 = por %p149, %p150
    %p152 = scmp.ne.s32.totalorder %s141, %s142
    %p153 = scmp.eq.s32.totalorder %s15, 0
    %p154 = por %p152, %p153
    %p155 = scmp.ne.s32.totalorder %s141, %s142
    %p156 = scmp.eq.s32.totalorder %s16, 1
    %p157 = por %p155, %p156
    %p159 = scmp.ne.s32.totalorder %s142, %s158
    %p160 = scmp.eq.s32.totalorder %s16, 0
    %p161 = por %p159, %p160
    %p162 = scmp.le.s32.totalorder 1, %s10
    %p163 = scmp.lt.s32.totalorder %s10, 3
    %p164 = pnand %p162, %p163
    %p165 = pneg %p164
    // Predicated region
    $region9: #{tpu_custom_call.1} parent=5 // pred_check
      _
    $region10: #{tpu_custom_call.1} parent=5 // pred_check_branch
      %167 = sbr.rel (%p164) target = $region12
    $region11: #{tpu_custom_call.1} parent=5 // pred_region
      %s168 = ssub.s32 %s10, 1
      // Predicated region
      $region13: #{tpu_custom_call.1} parent=11 // pred_check
        %p169 = pneg %p74
      $region14: #{tpu_custom_call.1} parent=11 // pred_check_branch
        %171 = sbr.rel (%p169) target = $region16
      $region15: #{tpu_custom_call.1} parent=11 // pred_region
        %p172 = scmp.lt.s32.totalorder %s20, 0
        %s173 = scalar_select %p172, %s20, 0
        %s174 = smul.addr %s173, 4
        %s175 = scalar_lea.vmem %s1, %s174
      $region16: #{tpu_custom_call.1} parent=11 // pred_fallthru
        _
      // Predicated region
      $region17: #{tpu_custom_call.1} parent=11 // pred_check
        %p176 = pneg %p100
      $region18: #{tpu_custom_call.1} parent=11 // pred_check_branch
        %178 = sbr.rel (%p176) target = $region20
      $region19: #{tpu_custom_call.1} parent=11 // pred_region
        %p179 = scmp.lt.s32.totalorder %s20, 0
        %s180 = scalar_select %p179, %s20, 0
        %s181 = scalar_lea.vmem %s2, %s180
      $region20: #{tpu_custom_call.1} parent=11 // pred_fallthru
        _
      // Predicated region
      $region21: #{tpu_custom_call.1} parent=11 // pred_check
        %p182 = pneg %p126
      $region22: #{tpu_custom_call.1} parent=11 // pred_check_branch
        %184 = sbr.rel (%p182) target = $region24
      $region23: #{tpu_custom_call.1} parent=11 // pred_region
        %p185 = scmp.lt.s32.totalorder %s20, 0
        %s186 = scalar_select %p185, %s20, 0
        %s187 = scalar_lea.vmem %s3, %s186
      $region24: #{tpu_custom_call.1} parent=11 // pred_fallthru
        _
    $region12: #{tpu_custom_call.1} parent=5 // pred_fallthru
      _
    %p188 = scmp.lt.s32.totalorder %s10, 2
    // Predicated region
    $region25: #{tpu_custom_call.1} parent=5 // pred_check
      %p189 = pneg %p188
    $region26: #{tpu_custom_call.1} parent=5 // pred_check_branch
      %191 = sbr.rel (%p189) target = $region28
    $region27: #{tpu_custom_call.1} parent=5 // pred_region
      // Predicated region
      $region29: #{tpu_custom_call.1} parent=27 // pred_check
        %p192 = pneg %p42
      $region30: #{tpu_custom_call.1} parent=27 // pred_check_branch
        %194 = sbr.rel (%p192) target = $region32
      $region31: #{tpu_custom_call.1} parent=27 // pred_region
        %s195 = smul.u32 32, %s17
        %p196 = scmp.lt.s32.totalorder %s195, 63
        %s197 = scalar_select %p196, %s195, 63
        %s198 = smul.addr %s197, 2
        %s199 = smul.addr %s198, 4
        %s200 = scalar_lea.vmem %s0, %s199
        %s201 = smul.u32 32, %s17
      $region32: #{tpu_custom_call.1} parent=27 // pred_fallthru
        _
    $region28: #{tpu_custom_call.1} parent=5 // pred_fallthru
      _
    %p202 = scmp.le.s32.totalorder 1, %s10
    %p203 = scmp.lt.s32.totalorder %s10, 3
    %p204 = pnand %p202, %p203
    %p205 = pneg %p204
    // Predicated region
    $region33: #{tpu_custom_call.1} parent=5 // pred_check
      _
    $region34: #{tpu_custom_call.1} parent=5 // pred_check_branch
      %207 = sbr.rel (%p204) target = $region36
    $region35: #{tpu_custom_call.1} parent=5 // pred_region
      %s208 = ssub.s32 %s10, 1
      %s209 = smul.u32 32, %s19
      %p210 = scmp.lt.s32.totalorder %s209, 63
      %s211 = scalar_select %p210, %s209, 63
      %s212 = smul.addr %s211, 2
      %s213 = smul.addr %s212, 4
      %s214 = scalar_lea.vmem %s0, %s213
      %p215 = pneg %p48
      %p216 = pneg %p45
      %p217 = scmp.lt.s32.totalorder %s20, 0
      %s218 = scalar_select %p217, %s20, 0
      %s219 = smul.addr %s218, 4
      %s220 = scalar_lea.vmem %s1, %s219
      %p221 = pneg %p74
      %p222 = pneg %p71
      %p223 = scmp.lt.s32.totalorder %s20, 0
      %s224 = scalar_select %p223, %s20, 0
      %s225 = scalar_lea.vmem %s2, %s224
      %p226 = pneg %p100
      %p227 = pneg %p97
      %p228 = scmp.lt.s32.totalorder %s20, 0
      %s229 = scalar_select %p228, %s20, 0
      %s230 = scalar_lea.vmem %s3, %s229
      %p231 = pneg %p126
      %p232 = pneg %p123
      %p233 = pneg %p154
      %p234 = pneg %p151
      %s235 = smul.u32 32, %s19
      %p236 = scmp.lt.s32.totalorder %s235, 63
      %s237 = scalar_select %p236, %s235, 63
      %p238 = scmp.lt.s32.totalorder %s20, 0
      %s239 = scalar_select %p238, %s20, 0
      %s240 = sadd.s32 %s239, %s237
      %s241 = smul.addr %s240, 8
      %s242 = scalar_lea.vmem %s4, %s241
      %s243 = smul.u32 32, %s19
      %p244 = scmp.lt.s32.totalorder %s243, 63
      %s245 = scalar_select %p244, %s243, 63
      %s246 = smul.addr %s245, 2
      %s247 = smul.addr %s246, 4
      %s248 = scalar_lea.vmem %s0, %s247
      %s249 = smul.u32 32, %s19
      %p250 = scmp.lt.s32.totalorder %s20, 0
      %s251 = scalar_select %p250, %s20, 0
      %s252 = smul.addr %s251, 4
      %s253 = scalar_lea.vmem %s1, %s252
      %p254 = scmp.lt.s32.totalorder %s20, 0
      %s255 = scalar_select %p254, %s20, 0
      %s256 = scalar_lea.vmem %s2, %s255
      %p257 = scmp.lt.s32.totalorder %s20, 0
      %s258 = scalar_select %p257, %s20, 0
      %s259 = scalar_lea.vmem %s3, %s258
      %s260 = smul.u32 32, %s19
      %p261 = scmp.lt.s32.totalorder %s260, 63
      %s262 = scalar_select %p261, %s260, 63
      %p263 = scmp.lt.s32.totalorder %s20, 0
      %s264 = scalar_select %p263, %s20, 0
      %s265 = sadd.s32 %s264, %s262
      %s266 = smul.addr %s265, 8
      %s267 = scalar_lea.vmem %s4, %s266
      %s268 = smul.u32 32, %s19
      %v270 = vld [vmem:[%s248] sm:$0xff]
      %v271 = vld [vmem:[%s248 + $0x8] sm:$0xff]
      %v272 = vld [vmem:[%s248 + $0x10] sm:$0xff]
      %v273 = vld [vmem:[%s248 + $0x18] sm:$0xff]
      %v274 = vld [vmem:[%s248 + $0x20] sm:$0xff]
      %v275 = vld [vmem:[%s248 + $0x28] sm:$0xff]
      %v276 = vld [vmem:[%s248 + $0x30] sm:$0xff]
      %v277 = vld [vmem:[%s248 + $0x38] sm:$0xff]
      %v278 = vld [vmem:[%s248 + $0x40] sm:$0xff]
      %v279 = vld [vmem:[%s248 + $0x48] sm:$0xff]
      %v280 = vld [vmem:[%s248 + $0x50] sm:$0xff]
      %v281 = vld [vmem:[%s248 + $0x58] sm:$0xff]
      %v282 = vld [vmem:[%s248 + $0x60] sm:$0xff]
      %v283 = vld [vmem:[%s248 + $0x68] sm:$0xff]
      %v284 = vld [vmem:[%s248 + $0x70] sm:$0xff]
      %v285 = vld [vmem:[%s248 + $0x78] sm:$0xff]
      %v286 = vld [vmem:[%s248 + $0x80] sm:$0xff]
      %v287 = vld [vmem:[%s248 + $0x88] sm:$0xff]
      %v288 = vld [vmem:[%s248 + $0x90] sm:$0xff]
      %v289 = vld [vmem:[%s248 + $0x98] sm:$0xff]
      %v290 = vld [vmem:[%s248 + $0xa0] sm:$0xff]
      %v291 = vld [vmem:[%s248 + $0xa8] sm:$0xff]
      %v292 = vld [vmem:[%s248 + $0xb0] sm:$0xff]
      %v293 = vld [vmem:[%s248 + $0xb8] sm:$0xff]
      %v294 = vld [vmem:[%s248 + $0xc0] sm:$0xff]
      %v295 = vld [vmem:[%s248 + $0xc8] sm:$0xff]
      %v296 = vld [vmem:[%s248 + $0xd0] sm:$0xff]
      %v297 = vld [vmem:[%s248 + $0xd8] sm:$0xff]
      %v298 = vld [vmem:[%s248 + $0xe0] sm:$0xff]
      %v299 = vld [vmem:[%s248 + $0xe8] sm:$0xff]
      %v300 = vld [vmem:[%s248 + $0xf0] sm:$0xff]
      %v301 = vld [vmem:[%s248 + $0xf8] sm:$0xff]
      %v302 = vld [vmem:[%s253] sm:$0xf]
      %v303 = vld [vmem:[%s253 + $0x4] sm:$0xf]
      %v304 = vld [vmem:[%s253 + $0x8] sm:$0xf]
      %v305 = vld [vmem:[%s253 + $0xc] sm:$0xf]
      %v306 = vld [vmem:[%s253 + $0x10] sm:$0xf]
      %v307 = vld [vmem:[%s253 + $0x14] sm:$0xf]
      %v308 = vld [vmem:[%s253 + $0x18] sm:$0xf]
      %v309 = vld [vmem:[%s253 + $0x1c] sm:$0xf]
      %v310 = vld [vmem:[%s253 + $0x20] sm:$0xf]
      %v311 = vld [vmem:[%s253 + $0x24] sm:$0xf]
      %v312 = vld [vmem:[%s253 + $0x28] sm:$0xf]
      %v313 = vld [vmem:[%s253 + $0x2c] sm:$0xf]
      %v314 = vld [vmem:[%s253 + $0x30] sm:$0xf]
      %v315 = vld [vmem:[%s253 + $0x34] sm:$0xf]
      %v316 = vld [vmem:[%s253 + $0x38] sm:$0xf]
      %v317 = vld [vmem:[%s253 + $0x3c] sm:$0xf]
      %v318 = vld [vmem:[%s253 + $0x40] sm:$0xf]
      %v319 = vld [vmem:[%s253 + $0x44] sm:$0xf]
      %v320 = vld [vmem:[%s253 + $0x48] sm:$0x3]
      %v353 = vunpack.c.l.b16 %v270
      %v354 = vunpack.c.h.b16 %v270
      %v355 = vunpack.c.l.b16 %v271
      %v356 = vunpack.c.h.b16 %v271
      %v357 = vunpack.c.l.b16 %v272
      %v358 = vunpack.c.h.b16 %v272
      %v359 = vunpack.c.l.b16 %v273
      %v360 = vunpack.c.h.b16 %v273
      %v361 = vunpack.c.l.b16 %v274
      %v362 = vunpack.c.h.b16 %v274
      %v363 = vunpack.c.l.b16 %v275
      %v364 = vunpack.c.h.b16 %v275
      %v365 = vunpack.c.l.b16 %v276
      %v366 = vunpack.c.h.b16 %v276
      %v367 = vunpack.c.l.b16 %v277
      %v368 = vunpack.c.h.b16 %v277
      %v369 = vunpack.c.l.b16 %v278
      %v370 = vunpack.c.h.b16 %v278
      %v371 = vunpack.c.l.b16 %v279
      %v372 = vunpack.c.h.b16 %v279
      %v373 = vunpack.c.l.b16 %v280
      %v374 = vunpack.c.h.b16 %v280
      %v375 = vunpack.c.l.b16 %v281
      %v376 = vunpack.c.h.b16 %v281
      %v377 = vunpack.c.l.b16 %v282
      %v378 = vunpack.c.h.b16 %v282
      %v379 = vunpack.c.l.b16 %v283
      %v380 = vunpack.c.h.b16 %v283
      %v381 = vunpack.c.l.b16 %v284
      %v382 = vunpack.c.h.b16 %v284
      %v383 = vunpack.c.l.b16 %v285
      %v384 = vunpack.c.h.b16 %v285
      %v385 = vunpack.c.l.b16 %v286
      %v386 = vunpack.c.h.b16 %v286
      %v387 = vunpack.c.l.b16 %v287
      %v388 = vunpack.c.h.b16 %v287
      %v389 = vunpack.c.l.b16 %v288
      %v390 = vunpack.c.h.b16 %v288
      %v391 = vunpack.c.l.b16 %v289
      %v392 = vunpack.c.h.b16 %v289
      %v393 = vunpack.c.l.b16 %v290
      %v394 = vunpack.c.h.b16 %v290
      %v395 = vunpack.c.l.b16 %v291
      %v396 = vunpack.c.h.b16 %v291
      %v397 = vunpack.c.l.b16 %v292
      %v398 = vunpack.c.h.b16 %v292
      %v399 = vunpack.c.l.b16 %v293
      %v400 = vunpack.c.h.b16 %v293
      %v401 = vunpack.c.l.b16 %v294
      %v402 = vunpack.c.h.b16 %v294
      %v403 = vunpack.c.l.b16 %v295
      %v404 = vunpack.c.h.b16 %v295
      %v405 = vunpack.c.l.b16 %v296
      %v406 = vunpack.c.h.b16 %v296
      %v407 = vunpack.c.l.b16 %v297
      %v408 = vunpack.c.h.b16 %v297
      %v409 = vunpack.c.l.b16 %v298
      %v410 = vunpack.c.h.b16 %v298
      %v411 = vunpack.c.l.b16 %v299
      %v412 = vunpack.c.h.b16 %v299
      %v413 = vunpack.c.l.b16 %v300
      %v414 = vunpack.c.h.b16 %v300
      %v415 = vunpack.c.l.b16 %v301
      %v416 = vunpack.c.h.b16 %v301
      %v417 = vpack.c.b16 %v355, %v353
      %v418 = vpack.c.b16 %v356, %v354
      %v419 = vpack.c.b16 %v359, %v357
      %v420 = vpack.c.b16 %v360, %v358
      %v421 = vpack.c.b16 %v363, %v361
      %v422 = vpack.c.b16 %v364, %v362
      %v423 = vpack.c.b16 %v367, %v365
      %v424 = vpack.c.b16 %v368, %v366
      %v425 = vpack.c.b16 %v371, %v369
      %v426 = vpack.c.b16 %v372, %v370
      %v427 = vpack.c.b16 %v375, %v373
      %v428 = vpack.c.b16 %v376, %v374
      %v429 = vpack.c.b16 %v379, %v377
      %v430 = vpack.c.b16 %v380, %v378
      %v431 = vpack.c.b16 %v383, %v381
      %v432 = vpack.c.b16 %v384, %v382
      %v433 = vpack.c.b16 %v387, %v385
      %v434 = vpack.c.b16 %v388, %v386
      %v435 = vpack.c.b16 %v391, %v389
      %v436 = vpack.c.b16 %v392, %v390
      %v437 = vpack.c.b16 %v395, %v393
      %v438 = vpack.c.b16 %v396, %v394
      %v439 = vpack.c.b16 %v399, %v397
      %v440 = vpack.c.b16 %v400, %v398
      %v441 = vpack.c.b16 %v403, %v401
      %v442 = vpack.c.b16 %v404, %v402
      %v443 = vpack.c.b16 %v407, %v405
      %v444 = vpack.c.b16 %v408, %v406
      %v445 = vpack.c.b16 %v411, %v409
      %v446 = vpack.c.b16 %v412, %v410
      %v447 = vpack.c.b16 %v415, %v413
      %v448 = vpack.c.b16 %v416, %v414
      %v484 = vunpack.c.l.b16 %v302
      %v485 = vunpack.c.l.b16 %v303
      %v486 = vunpack.c.l.b16 %v304
      %v487 = vunpack.c.l.b16 %v305
      %v488 = vunpack.c.l.b16 %v306
      %v489 = vunpack.c.l.b16 %v307
      %v490 = vunpack.c.l.b16 %v308
      %v491 = vunpack.c.l.b16 %v309
      %v492 = vunpack.c.l.b16 %v310
      %v493 = vunpack.c.l.b16 %v311
      %v494 = vunpack.c.l.b16 %v312
      %v495 = vunpack.c.l.b16 %v313
      %v496 = vunpack.c.l.b16 %v314
      %v497 = vunpack.c.l.b16 %v315
      %v498 = vunpack.c.l.b16 %v316
      %v499 = vunpack.c.l.b16 %v317
      %v500 = vunpack.c.l.b16 %v318
      %v501 = vunpack.c.l.b16 %v319
      %v502 = vunpack.c.l.b16 %v320
      %v503 = vpack.c.b16 %v485, %v484
      %v504 = vpack.c.b16 %v487, %v486
      %v505 = vpack.c.b16 %v489, %v488
      %v506 = vpack.c.b16 %v491, %v490
      %v507 = vpack.c.b16 %v493, %v492
      %v508 = vpack.c.b16 %v495, %v494
      %v509 = vpack.c.b16 %v497, %v496
      %v510 = vpack.c.b16 %v499, %v498
      %v511 = vpack.c.b16 %v501, %v500
      %v512 = vpack.c.b16 %v502, %v502
      %vm522 = vcmask 154624
      %v524 = vsel %vm522, %v418, 0
      %v527 = vsel %vm522, %v420, 0
      %v530 = vsel %vm522, %v422, 0
      %v533 = vsel %vm522, %v424, 0
      %v536 = vsel %vm522, %v426, 0
      %v539 = vsel %vm522, %v428, 0
      %v542 = vsel %vm522, %v430, 0
      %v545 = vsel %vm522, %v432, 0
      %v548 = vsel %vm522, %v434, 0
      %v551 = vsel %vm522, %v436, 0
      %v554 = vsel %vm522, %v438, 0
      %v557 = vsel %vm522, %v440, 0
      %v560 = vsel %vm522, %v442, 0
      %v563 = vsel %vm522, %v444, 0
      %v566 = vsel %vm522, %v446, 0
      %v569 = vsel %vm522, %v448, 0
      %vm571 = vcmask 1040384
      %vm572 = vcmask 1041408
      %v573 = vsel %vm571, 4294967295, 65535
      %v574 = vsel %vm572, %v573, 0
      %v576 = vand.u32 %v512, %v574
      %578 = vmatprep.subr.bf16.mxu0 0
      %579 = vmatpush1.bf16.msra.mxu0 %v503
      %580 = vmatprep.subr.bf16.mxu0 0
      %581 = vmatpush1.bf16.msra.mxu0 %v504
      %582 = vmatprep.subr.bf16.mxu0 0
      %583 = vmatpush1.bf16.msra.mxu0 %v505
      %584 = vmatprep.subr.bf16.mxu0 0
      %585 = vmatpush1.bf16.msra.mxu0 %v506
      %586 = vmatprep.subr.bf16.mxu0 0
      %587 = vmatpush1.bf16.msra.mxu0 %v507
      %588 = vmatprep.subr.bf16.mxu0 0
      %589 = vmatpush1.bf16.msra.mxu0 %v508
      %590 = vmatprep.subr.bf16.mxu0 0
      %591 = vmatpush1.bf16.msra.mxu0 %v509
      %592 = vmatprep.subr.bf16.mxu0 0
      %593 = vmatpush1.bf16.msra.mxu0 %v510
      %594 = vmatprep.subr.bf16.mxu0 0
      %595 = vmatpush1.bf16.msra.mxu0 %v511
      %596 = vmatprep.subr.bf16.mxu0 0
      %597 = vmatpush1.bf16.msra.mxu0 %v576
      %598 = vmatprep.subr.bf16.mxu0 0
      %599 = vmatpush1.bf16.msra.mxu0 0
      %600 = vmatprep.subr.bf16.mxu0 0
      %601 = vmatpush1.bf16.msra.mxu0 0
      %602 = vmatprep.subr.bf16.mxu0 0
      %603 = vmatpush1.bf16.msra.mxu0 0
      %604 = vmatprep.subr.bf16.mxu0 0
      %605 = vmatpush1.bf16.msra.mxu0 0
      %606 = vmatprep.subr.bf16.mxu0 0
      %607 = vmatpush1.bf16.msra.mxu0 0
      %608 = vmatprep.subr.bf16.mxu0 0
      %609 = vmatpush1.bf16.msra.mxu0 0
      %610 = vmatprep.mubr.bf16.mxu0 %v524
      %611 = vmatmul.mubr.bf16.gmra.mrb[0].mxu0 %v417
      %v612 = vpop.f32.mrb[0].mxu0
      %v613 = vadd.f32 0.0, %v612
      %v614 = vpop.f32.mrb[0].mxu0
      %v615 = vpop.f32.mrb[0].mxu0
      %v616 = vadd.f32 0.0, %v615
      %v617 = vpop.f32.mrb[0].mxu0
      %618 = vmatprep.mubr.bf16.mxu0 %v527
      %619 = vmatmul.mubr.bf16.gmra.mrb[0].mxu0 %v419
      %v620 = vpop.f32.mrb[0].mxu0
      %v621 = vadd.f32 0.0, %v620
      %v622 = vpop.f32.mrb[0].mxu0
      %v623 = vpop.f32.mrb[0].mxu0
      %v624 = vadd.f32 0.0, %v623
      %v625 = vpop.f32.mrb[0].mxu0
      %626 = vmatprep.mubr.bf16.mxu0 %v530
      %627 = vmatmul.mubr.bf16.gmra.mrb[0].mxu0 %v421
      %v628 = vpop.f32.mrb[0].mxu0
      %v629 = vadd.f32 0.0, %v628
      %v630 = vpop.f32.mrb[0].mxu0
      %v631 = vpop.f32.mrb[0].mxu0
      %v632 = vadd.f32 0.0, %v631
      %v633 = vpop.f32.mrb[0].mxu0
      %634 = vmatprep.mubr.bf16.mxu0 %v533
      %635 = vmatmul.mubr.bf16.gmra.mrb[0].mxu0 %v423
      %v636 = vpop.f32.mrb[0].mxu0
      %v637 = vadd.f32 0.0, %v636
      %v638 = vpop.f32.mrb[0].mxu0
      %v639 = vpop.f32.mrb[0].mxu0
      %v640 = vadd.f32 0.0, %v639
      %v641 = vpop.f32.mrb[0].mxu0
      %642 = vmatprep.mubr.bf16.mxu0 %v536
      %643 = vmatmul.mubr.bf16.gmra.mrb[0].mxu0 %v425
      %v644 = vpop.f32.mrb[0].mxu0
      %v645 = vadd.f32 0.0, %v644
      %v646 = vpop.f32.mrb[0].mxu0
      %v647 = vpop.f32.mrb[0].mxu0
      %v648 = vadd.f32 0.0, %v647
      %v649 = vpop.f32.mrb[0].mxu0
      %650 = vmatprep.mubr.bf16.mxu0 %v539
      %651 = vmatmul.mubr.bf16.gmra.mrb[0].mxu0 %v427
      %v652 = vpop.f32.mrb[0].mxu0
      %v653 = vadd.f32 0.0, %v652
      %v654 = vpop.f32.mrb[0].mxu0
      %v655 = vpop.f32.mrb[0].mxu0
      %v656 = vadd.f32 0.0, %v655
      %v657 = vpop.f32.mrb[0].mxu0
      %658 = vmatprep.mubr.bf16.mxu0 %v542
      %659 = vmatmul.mubr.bf16.gmra.mrb[0].mxu0 %v429
      %v660 = vpop.f32.mrb[0].mxu0
      %v661 = vadd.f32 0.0, %v660
      %v662 = vpop.f32.mrb[0].mxu0
      %v663 = vpop.f32.mrb[0].mxu0
      %v664 = vadd.f32 0.0, %v663
      %v665 = vpop.f32.mrb[0].mxu0
      %666 = vmatprep.mubr.bf16.mxu0 %v545
      %667 = vmatmul.mubr.bf16.gmra.mrb[0].mxu0 %v431
      %v668 = vpop.f32.mrb[0].mxu0
      %v669 = vadd.f32 0.0, %v668
      %v670 = vpop.f32.mrb[0].mxu0
      %v671 = vpop.f32.mrb[0].mxu0
      %v672 = vadd.f32 0.0, %v671
      %v673 = vpop.f32.mrb[0].mxu0
      %674 = vmatprep.mubr.bf16.mxu0 %v548
      %675 = vmatmul.mubr.bf16.gmra.mrb[0].mxu0 %v433
      %v676 = vpop.f32.mrb[0].mxu0
      %v677 = vadd.f32 0.0, %v676
      %v678 = vpop.f32.mrb[0].mxu0
      %v679 = vpop.f32.mrb[0].mxu0
      %v680 = vadd.f32 0.0, %v679
      %v681 = vpop.f32.mrb[0].mxu0
      %682 = vmatprep.mubr.bf16.mxu0 %v551
      %683 = vmatmul.mubr.bf16.gmra.mrb[0].mxu0 %v435
      %v684 = vpop.f32.mrb[0].mxu0
      %v685 = vadd.f32 0.0, %v684
      %v686 = vpop.f32.mrb[0].mxu0
      %v687 = vpop.f32.mrb[0].mxu0
      %v688 = vadd.f32 0.0, %v687
      %v689 = vpop.f32.mrb[0].mxu0
      %690 = vmatprep.mubr.bf16.mxu0 %v554
      %691 = vmatmul.mubr.bf16.gmra.mrb[0].mxu0 %v437
      %v692 = vpop.f32.mrb[0].mxu0
      %v693 = vadd.f32 0.0, %v692
      %v694 = vpop.f32.mrb[0].mxu0
      %v695 = vpop.f32.mrb[0].mxu0
      %v696 = vadd.f32 0.0, %v695
      %v697 = vpop.f32.mrb[0].mxu0
      %698 = vmatprep.mubr.bf16.mxu0 %v557
      %699 = vmatmul.mubr.bf16.gmra.mrb[0].mxu0 %v439
      %v700 = vpop.f32.mrb[0].mxu0
      %v701 = vadd.f32 0.0, %v700
      %v702 = vpop.f32.mrb[0].mxu0
      %v703 = vpop.f32.mrb[0].mxu0
      %v704 = vadd.f32 0.0, %v703
      %v705 = vpop.f32.mrb[0].mxu0
      %706 = vmatprep.mubr.bf16.mxu0 %v560
      %707 = vmatmul.mubr.bf16.gmra.mrb[0].mxu0 %v441
      %v708 = vpop.f32.mrb[0].mxu0
      %v709 = vadd.f32 0.0, %v708
      %v710 = vpop.f32.mrb[0].mxu0
      %v711 = vpop.f32.mrb[0].mxu0
      %v712 = vadd.f32 0.0, %v711
      %v713 = vpop.f32.mrb[0].mxu0
      %714 = vmatprep.mubr.bf16.mxu0 %v563
      %715 = vmatmul.mubr.bf16.gmra.mrb[0].mxu0 %v443
      %v716 = vpop.f32.mrb[0].mxu0
      %v717 = vadd.f32 0.0, %v716
      %v718 = vpop.f32.mrb[0].mxu0
      %v719 = vpop.f32.mrb[0].mxu0
      %v720 = vadd.f32 0.0, %v719
      %v721 = vpop.f32.mrb[0].mxu0
      %722 = vmatprep.mubr.bf16.mxu0 %v566
      %723 = vmatmul.mubr.bf16.gmra.mrb[0].mxu0 %v445
      %v724 = vpop.f32.mrb[0].mxu0
      %v725 = vadd.f32 0.0, %v724
      %v726 = vpop.f32.mrb[0].mxu0
      %v727 = vpop.f32.mrb[0].mxu0
      %v728 = vadd.f32 0.0, %v727
      %v729 = vpop.f32.mrb[0].mxu0
      %730 = vmatprep.mubr.bf16.mxu0 %v569
      %731 = vmatmul.mubr.bf16.gmra.mrb[0].mxu0 %v447
      %v732 = vpop.f32.mrb[0].mxu0
      %v733 = vadd.f32 0.0, %v732
      %v734 = vpop.f32.mrb[0].mxu0
      %v735 = vpop.f32.mrb[0].mxu0
      %v736 = vadd.f32 0.0, %v735
      %v737 = vpop.f32.mrb[0].mxu0
      %738 = vdwg.mxu0
      %v739 = vld [vmem:[%s256] sm:$0x1]
      %v741 = vlaneseq
      %v742 = vshrl.u32 %v741, 7
      %v743 = vsub.s32 0, %v742
      %v744 = vrot.slane %v739, %v743
      %v746 = vmul.f32 %v613, %v744
      %v747 = vmul.f32 %v616, %v744
      %v748 = vmul.f32 %v621, %v744
      %v749 = vmul.f32 %v624, %v744
      %v750 = vmul.f32 %v629, %v744
      %v751 = vmul.f32 %v632, %v744
      %v752 = vmul.f32 %v637, %v744
      %v753 = vmul.f32 %v640, %v744
      %v754 = vmul.f32 %v645, %v744
      %v755 = vmul.f32 %v648, %v744
      %v756 = vmul.f32 %v653, %v744
      %v757 = vmul.f32 %v656, %v744
      %v758 = vmul.f32 %v661, %v744
      %v759 = vmul.f32 %v664, %v744
      %v760 = vmul.f32 %v669, %v744
      %v761 = vmul.f32 %v672, %v744
      %v762 = vmul.f32 %v677, %v744
      %v763 = vmul.f32 %v680, %v744
      %v764 = vmul.f32 %v685, %v744
      %v765 = vmul.f32 %v688, %v744
      %v766 = vmul.f32 %v693, %v744
      %v767 = vmul.f32 %v696, %v744
      %v768 = vmul.f32 %v701, %v744
      %v769 = vmul.f32 %v704, %v744
      %v770 = vmul.f32 %v709, %v744
      %v771 = vmul.f32 %v712, %v744
      %v772 = vmul.f32 %v717, %v744
      %v773 = vmul.f32 %v720, %v744
      %v774 = vmul.f32 %v725, %v744
      %v775 = vmul.f32 %v728, %v744
      %v776 = vmul.f32 %v733, %v744
      %v777 = vmul.f32 %v736, %v744
      %v778 = vld [vmem:[%s259] sm:$0x1]
      %v780 = vlaneseq
      %v781 = vshrl.u32 %v780, 7
      %v782 = vsub.s32 0, %v781
      %v783 = vrot.slane %v778, %v782
      %v785 = vadd.f32 %v746, %v783
      %v786 = vadd.f32 %v747, %v783
      %v787 = vadd.f32 %v748, %v783
      %v788 = vadd.f32 %v749, %v783
      %v789 = vadd.f32 %v750, %v783
      %v790 = vadd.f32 %v751, %v783
      %v791 = vadd.f32 %v752, %v783
      %v792 = vadd.f32 %v753, %v783
      %v793 = vadd.f32 %v754, %v783
      %v794 = vadd.f32 %v755, %v783
      %v795 = vadd.f32 %v756, %v783
      %v796 = vadd.f32 %v757, %v783
      %v797 = vadd.f32 %v758, %v783
      %v798 = vadd.f32 %v759, %v783
      %v799 = vadd.f32 %v760, %v783
      %v800 = vadd.f32 %v761, %v783
      %v801 = vadd.f32 %v762, %v783
      %v802 = vadd.f32 %v763, %v783
      %v803 = vadd.f32 %v764, %v783
      %v804 = vadd.f32 %v765, %v783
      %v805 = vadd.f32 %v766, %v783
      %v806 = vadd.f32 %v767, %v783
      %v807 = vadd.f32 %v768, %v783
      %v808 = vadd.f32 %v769, %v783
      %v809 = vadd.f32 %v770, %v783
      %v810 = vadd.f32 %v771, %v783
      %v811 = vadd.f32 %v772, %v783
      %v812 = vadd.f32 %v773, %v783
      %v813 = vadd.f32 %v774, %v783
      %v814 = vadd.f32 %v775, %v783
      %v815 = vadd.f32 %v776, %v783
      %v816 = vadd.f32 %v777, %v783
      %v817 = vmax.f32 %v785, 0.0
      %v818 = vmax.f32 %v786, 0.0
      %v819 = vmax.f32 %v787, 0.0
      %v820 = vmax.f32 %v788, 0.0
      %v821 = vmax.f32 %v789, 0.0
      %v822 = vmax.f32 %v790, 0.0
      %v823 = vmax.f32 %v791, 0.0
      %v824 = vmax.f32 %v792, 0.0
      %v825 = vmax.f32 %v793, 0.0
      %v826 = vmax.f32 %v794, 0.0
      %v827 = vmax.f32 %v795, 0.0
      %v828 = vmax.f32 %v796, 0.0
      %v829 = vmax.f32 %v797, 0.0
      %v830 = vmax.f32 %v798, 0.0
      %v831 = vmax.f32 %v799, 0.0
      %v832 = vmax.f32 %v800, 0.0
      %v833 = vmax.f32 %v801, 0.0
      %v834 = vmax.f32 %v802, 0.0
      %v835 = vmax.f32 %v803, 0.0
      %v836 = vmax.f32 %v804, 0.0
      %v837 = vmax.f32 %v805, 0.0
      %v838 = vmax.f32 %v806, 0.0
      %v839 = vmax.f32 %v807, 0.0
      %v840 = vmax.f32 %v808, 0.0
      %v841 = vmax.f32 %v809, 0.0
      %v842 = vmax.f32 %v810, 0.0
      %v843 = vmax.f32 %v811, 0.0
      %v844 = vmax.f32 %v812, 0.0
      %v845 = vmax.f32 %v813, 0.0
      %v846 = vmax.f32 %v814, 0.0
      %v847 = vmax.f32 %v815, 0.0
      %v848 = vmax.f32 %v816, 0.0
      %vm849 = vcmask 523264
      %850 = vst.msk [vmem:[%s267] sm:$0xff] %vm849, %v817
      %851 = vst.msk [vmem:[%s267 + $0x8] sm:$0xff] %vm849, %v818
      %852 = vst.msk [vmem:[%s267 + $0x10] sm:$0xff] %vm849, %v819
      %853 = vst.msk [vmem:[%s267 + $0x18] sm:$0xff] %vm849, %v820
      %854 = vst.msk [vmem:[%s267 + $0x20] sm:$0xff] %vm849, %v821
      %855 = vst.msk [vmem:[%s267 + $0x28] sm:$0xff] %vm849, %v822
      %856 = vst.msk [vmem:[%s267 + $0x30] sm:$0xff] %vm849, %v823
      %857 = vst.msk [vmem:[%s267 + $0x38] sm:$0xff] %vm849, %v824
      %858 = vst.msk [vmem:[%s267 + $0x40] sm:$0xff] %vm849, %v825
      %859 = vst.msk [vmem:[%s267 + $0x48] sm:$0xff] %vm849, %v826
      %860 = vst.msk [vmem:[%s267 + $0x50] sm:$0xff] %vm849, %v827
      %861 = vst.msk [vmem:[%s267 + $0x58] sm:$0xff] %vm849, %v828
      %862 = vst.msk [vmem:[%s267 + $0x60] sm:$0xff] %vm849, %v829
      %863 = vst.msk [vmem:[%s267 + $0x68] sm:$0xff] %vm849, %v830
      %864 = vst.msk [vmem:[%s267 + $0x70] sm:$0xff] %vm849, %v831
      %865 = vst.msk [vmem:[%s267 + $0x78] sm:$0xff] %vm849, %v832
      %866 = vst.msk [vmem:[%s267 + $0x80] sm:$0xff] %vm849, %v833
      %867 = vst.msk [vmem:[%s267 + $0x88] sm:$0xff] %vm849, %v834
      %868 = vst.msk [vmem:[%s267 + $0x90] sm:$0xff] %vm849, %v835
      %869 = vst.msk [vmem:[%s267 + $0x98] sm:$0xff] %vm849, %v836
      %870 = vst.msk [vmem:[%s267 + $0xa0] sm:$0xff] %vm849, %v837
      %871 = vst.msk [vmem:[%s267 + $0xa8] sm:$0xff] %vm849, %v838
      %872 = vst.msk [vmem:[%s267 + $0xb0] sm:$0xff] %vm849, %v839
      %873 = vst.msk [vmem:[%s267 + $0xb8] sm:$0xff] %vm849, %v840
      %874 = vst.msk [vmem:[%s267 + $0xc0] sm:$0xff] %vm849, %v841
      %875 = vst.msk [vmem:[%s267 + $0xc8] sm:$0xff] %vm849, %v842
      %876 = vst.msk [vmem:[%s267 + $0xd0] sm:$0xff] %vm849, %v843
      %877 = vst.msk [vmem:[%s267 + $0xd8] sm:$0xff] %vm849, %v844
      %878 = vst.msk [vmem:[%s267 + $0xe0] sm:$0xff] %vm849, %v845
      %879 = vst.msk [vmem:[%s267 + $0xe8] sm:$0xff] %vm849, %v846
      %880 = vst.msk [vmem:[%s267 + $0xf0] sm:$0xff] %vm849, %v847
      %881 = vst.msk [vmem:[%s267 + $0xf8] sm:$0xff] %vm849, %v848
      %s882 = smul.u32 32, %s19
      %p883 = scmp.lt.s32.totalorder %s882, 63
      %s884 = scalar_select %p883, %s882, 63
      %p885 = scmp.lt.s32.totalorder %s20, 0
      %s886 = scalar_select %p885, %s20, 0
      %s887 = sadd.s32 %s886, %s884
      %s888 = smul.addr %s887, 8
      %s889 = scalar_lea.vmem %s4, %s888
      // Predicated region
      $region37: #{tpu_custom_call.1} parent=35 // pred_check
        %p890 = pneg %p151
      $region38: #{tpu_custom_call.1} parent=35 // pred_check_branch
        %892 = sbr.rel (%p890) target = $region40
      $region39: #{tpu_custom_call.1} parent=35 // pred_region
        %s893 = smul.u32 32, %s19
      $region40: #{tpu_custom_call.1} parent=35 // pred_fallthru
        _
    $region36: #{tpu_custom_call.1} parent=5 // pred_fallthru
      _
    %p894 = scmp.le.s32.totalorder 2, %s10
    // Predicated region
    $region41: #{tpu_custom_call.1} parent=5 // pred_check
      %p895 = pneg %p894
    $region42: #{tpu_custom_call.1} parent=5 // pred_check_branch
      %897 = sbr.rel (%p895) target = $region44
    $region43: #{tpu_custom_call.1} parent=5 // pred_region
      %s898 = ssub.s32 %s10, 2
      // Predicated region
      $region45: #{tpu_custom_call.1} parent=43 // pred_check
        %p899 = pneg %p157
      $region46: #{tpu_custom_call.1} parent=43 // pred_check_branch
        %901 = sbr.rel (%p899) target = $region48
      $region47: #{tpu_custom_call.1} parent=43 // pred_region
        %s902 = smul.u32 32, %s21
        %p903 = scmp.lt.s32.totalorder %s902, 63
        %s904 = scalar_select %p903, %s902, 63
        %p905 = scmp.lt.s32.totalorder %s22, 0
        %s906 = scalar_select %p905, %s22, 0
        %s907 = sadd.s32 %s906, %s904
        %s908 = smul.addr %s907, 8
        %s909 = scalar_lea.vmem %s4, %s908
      $region48: #{tpu_custom_call.1} parent=43 // pred_fallthru
        _
    $region44: #{tpu_custom_call.1} parent=5 // pred_fallthru
      _
  $region6: #{tpu_custom_call.1} parent=0 // loop_footer
    %s14 = sadd.s32 1, %s10
  $region7: #{tpu_custom_call.1} parent=0 // loop_footer_branch
    %9 = sbr.rel target = $region3
  $region8: #{tpu_custom_call.1} parent=0 // loop_exit
    _

</llo_original>
